<compile_context>
chip_gen: v6e
topology: v6e:2x2x1
jax: 0.10.0
libtpu: 0.0.40
codegen_flags: <defaults>
</compile_context>

<pallas_src>
import functools

import jax
import jax.numpy as jnp
from jax.experimental import pallas as pl
from jax.experimental.pallas import tpu as pltpu


def _round_up(n, m):
    return ((n + m - 1) // m) * m


def mlp_kernel(x_ref, w1_ref, b1_ref, w2_ref, b2_ref, w3_ref, b3_ref,
               w4_ref, b4_ref, o_ref):
    """Transposed MLP: features on sublanes, batch on the 128-lane axis.

    x_ref : (D, TILE_B)   bf16   streamed
    w{k}  : (out, in)     bf16   resident (PyTorch layout, used as h' = W @ h)
    b{k}  : (out, 1)      f32    resident
    w4    : (64, 1)       f32    resident (final layer on VPU + sublane reduce)
    o_ref : (1, TILE_B)   f32    streamed, lane-dense
    """
    h = x_ref[...]                                                      # (D, Tb) bf16
    h = jnp.dot(w1_ref[...], h, preferred_element_type=jnp.float32) + b1_ref[...]
    h = jnp.maximum(h, 0.0).astype(jnp.bfloat16)                        # (16, Tb)
    h = jnp.dot(w2_ref[...], h, preferred_element_type=jnp.float32) + b2_ref[...]
    h = jnp.maximum(h, 0.0).astype(jnp.bfloat16)                        # (32, Tb)
    h = jnp.dot(w3_ref[...], h, preferred_element_type=jnp.float32) + b3_ref[...]
    h = jnp.maximum(h, 0.0)                                             # (64, Tb) f32
    # fc4 (64 -> 1): an M=1 MXU pass is <1% utilized; do VPU multiply + XLU sublane reduce.
    out = jnp.sum(h * w4_ref[...], axis=0, keepdims=True) + b4_ref[...]  # (1, Tb) f32
    o_ref[...] = out.astype(o_ref.dtype)


@functools.partial(jax.jit, static_argnames=("tile_b",))
def simple_nn_forward(x, params, *, tile_b=8192):
    """x: (B, input_dim) f32.  params: PyTorch-layout weights w{k}:(out,in) f32, b{k}:(out,) f32."""
    B, D = x.shape

    # ---- batch tiling (lane axis) -------------------------------------------------------
    # tile_b is a multiple of 128 (lane-dense blocks).  For large batches cap the tile so
    # there are >= 4 grid steps (keeps v7x megacore sharding and per-core double buffering).
    tile_b = max(128, (int(tile_b) // 128) * 128)
    b_ceil = _round_up(B, 128)
    if b_ceil >= 4 * 128:
        tile_b = min(tile_b, max(128, ((b_ceil // 4) // 128) * 128))
    tile_b = min(tile_b, b_ceil)
    b_pad = _round_up(B, tile_b)

    # ---- layouts --------------------------------------------------------------------------
    bf = jnp.bfloat16
    # Batch on the 128-lane axis: x^T is (D, b_pad), fully lane-dense in HBM and VMEM.
    x_t = x.astype(bf).T
    if b_pad != B:
        x_t = jnp.pad(x_t, ((0, 0), (0, b_pad - B)))

    w1 = params["w1"].astype(bf)                           # (16, D)
    w2 = params["w2"].astype(bf)                           # (32, 16)
    w3 = params["w3"].astype(bf)                           # (64, 32)
    w4 = params["w4"].reshape(-1, 1).astype(jnp.float32)   # (64, 1) for the VPU final layer
    b1 = params["b1"].reshape(-1, 1).astype(jnp.float32)   # (16, 1)
    b2 = params["b2"].reshape(-1, 1).astype(jnp.float32)   # (32, 1)
    b3 = params["b3"].reshape(-1, 1).astype(jnp.float32)   # (64, 1)
    b4 = params["b4"].reshape(-1, 1).astype(jnp.float32)   # (1, 1)

    resident = lambda a: pl.BlockSpec(a.shape, lambda i: (0, 0))  # weights/biases stay in VMEM

    # Per-step VMEM is ~0.6 KiB per batch column (x + out double buffers + f32/bf16
    # intermediates); budget ~1 KiB/col plus slack, capped well under v7x's 64 MiB physical.
    vmem_bytes = int(min(48 * 1024 * 1024,
                         max(16 * 1024 * 1024, 1024 * tile_b + (4 << 20))))

    out = pl.pallas_call(
        mlp_kernel,
        out_shape=jax.ShapeDtypeStruct((1, b_pad), jnp.float32),
        grid=(b_pad // tile_b,),
        in_specs=[
            pl.BlockSpec((D, tile_b), lambda i: (0, i)),   # streamed x^T tile (lane-dense)
            resident(w1), resident(b1),
            resident(w2), resident(b2),
            resident(w3), resident(b3),
            resident(w4), resident(b4),
        ],
        out_specs=pl.BlockSpec((1, tile_b), lambda i: (0, i)),  # lane-dense output slab
        compiler_params=pltpu.CompilerParams(
            dimension_semantics=("parallel",),   # shard batch tiles across TCs on v7x
            vmem_limit_bytes=vmem_bytes,
        ),
    )(x_t, w1, b1, w2, b2, w3, b3, w4, b4)

    return out[:, :B].T   # back to (B, 1)


def init_params(input_dim, key):
    """Deterministic init mimicking PyTorch nn.Linear defaults, in PyTorch (out, in) layout."""
    dims = [(input_dim, 16), (16, 32), (32, 64), (64, 1)]
    params = {}
    keys = jax.random.split(key, 2 * len(dims))
    for i, (fan_in, fan_out) in enumerate(dims):
        bound = 1.0 / jnp.sqrt(jnp.float32(fan_in))
        params[f"w{i + 1}"] = jax.random.uniform(keys[2 * i], (fan_out, fan_in),
                                                 minval=-bound, maxval=bound, dtype=jnp.float32)
        params[f"b{i + 1}"] = jax.random.uniform(keys[2 * i + 1], (fan_out,),
                                                 minval=-bound, maxval=bound, dtype=jnp.float32)
    return params


def reference_forward_f32(x, params):
    h = jnp.maximum(x @ params["w1"].T + params["b1"], 0.0)
    h = jnp.maximum(h @ params["w2"].T + params["b2"], 0.0)
    h = jnp.maximum(h @ params["w3"].T + params["b3"], 0.0)
    return h @ params["w4"].T + params["b4"]


def reference_forward_bf16(x, params):
    """Same mixed-precision recipe as the kernel (bf16 MXU inputs, fp32 accumulate/final layer)."""
    bf = jnp.bfloat16
    h = jnp.dot(x.astype(bf), params["w1"].astype(bf).T,
                preferred_element_type=jnp.float32) + params["b1"]
    h = jnp.maximum(h, 0.0).astype(bf)
    h = jnp.dot(h, params["w2"].astype(bf).T,
                preferred_element_type=jnp.float32) + params["b2"]
    h = jnp.maximum(h, 0.0).astype(bf)
    h = jnp.dot(h, params["w3"].astype(bf).T,
                preferred_element_type=jnp.float32) + params["b3"]
    h = jnp.maximum(h, 0.0)                      # f32, matches kernel's fp32 final layer
    return h @ params["w4"].T + params["b4"]


if __name__ == "__main__":
    key = jax.random.PRNGKey(0)
    k_x, k_p, k_x2, k_x3 = jax.random.split(key, 4)

    input_dim = 8
    params = init_params(input_dim, k_p)

    # Small aligned batch (single grid step).
    x = jax.random.normal(k_x, (64, input_dim), dtype=jnp.float32)
    out = jax.block_until_ready(simple_nn_forward(x, params))
    assert out.shape == (64, 1), out.shape
    assert jnp.allclose(out, reference_forward_bf16(x, params), atol=1e-3, rtol=1e-3), \
        "mismatch vs bf16-precision reference"
    assert jnp.allclose(out, reference_forward_f32(x, params), atol=5e-2, rtol=5e-2), \
        "mismatch vs fp32 reference"

    # Non-multiple-of-128 batch exercises the padding path.
    x2 = jax.random.normal(k_x2, (37, input_dim), dtype=jnp.float32)
    out2 = jax.block_until_ready(simple_nn_forward(x2, params))
    assert out2.shape == (37, 1), out2.shape
    assert jnp.allclose(out2, reference_forward_bf16(x2, params), atol=1e-3, rtol=1e-3)

    # Batch large enough for a multi-step grid (4 steps of 256 rows here).
    x3 = jax.random.normal(k_x3, (1000, input_dim), dtype=jnp.float32)
    out3 = jax.block_until_ready(simple_nn_forward(x3, params))
    assert out3.shape == (1000, 1), out3.shape
    assert jnp.allclose(out3, reference_forward_bf16(x3, params), atol=1e-3, rtol=1e-3)

    print("KERNEL_OK")
</pallas_src>

<mosaic_0001>
module attributes {stable_mosaic.version = 11 : i64} {
  func.func @mlp_kernel(%arg0: i32, %arg1: memref<8x128xbf16, #tpu.memory_space<vmem>>, %arg2: memref<16x8xbf16, #tpu.memory_space<vmem>>, %arg3: memref<16x1xf32, #tpu.memory_space<vmem>>, %arg4: memref<32x16xbf16, #tpu.memory_space<vmem>>, %arg5: memref<32x1xf32, #tpu.memory_space<vmem>>, %arg6: memref<64x32xbf16, #tpu.memory_space<vmem>>, %arg7: memref<64x1xf32, #tpu.memory_space<vmem>>, %arg8: memref<64x1xf32, #tpu.memory_space<vmem>>, %arg9: memref<1x1xf32, #tpu.memory_space<vmem>>, %arg10: memref<1x128xf32, #tpu.memory_space<vmem>>) attributes {dimension_semantics = [#tpu.dimension_semantics<parallel>], iteration_bounds = array<i64: 1>, scalar_prefetch = 0 : i64, scratch_operands = 0 : i64, tpu.core_type = #tpu.core_type<tc>, window_params = [{transform_indices = @transform_0, window_bounds = array<i64: 8, 128>}, {pipeline_mode = #tpu.pipeline_mode<synchronous>, transform_indices = @transform_1, window_bounds = array<i64: 16, 8>}, {pipeline_mode = #tpu.pipeline_mode<synchronous>, transform_indices = @transform_2, window_bounds = array<i64: 16, 1>}, {pipeline_mode = #tpu.pipeline_mode<synchronous>, transform_indices = @transform_3, window_bounds = array<i64: 32, 16>}, {pipeline_mode = #tpu.pipeline_mode<synchronous>, transform_indices = @transform_4, window_bounds = array<i64: 32, 1>}, {pipeline_mode = #tpu.pipeline_mode<synchronous>, transform_indices = @transform_5, window_bounds = array<i64: 64, 32>}, {pipeline_mode = #tpu.pipeline_mode<synchronous>, transform_indices = @transform_6, window_bounds = array<i64: 64, 1>}, {pipeline_mode = #tpu.pipeline_mode<synchronous>, transform_indices = @transform_7, window_bounds = array<i64: 64, 1>}, {pipeline_mode = #tpu.pipeline_mode<synchronous>, transform_indices = @transform_8, window_bounds = array<i64: 1, 1>}, {transform_indices = @transform_9, window_bounds = array<i64: 1, 128>}]} {
    %c0 = arith.constant 0 : index
    %c0_0 = arith.constant 0 : index
    %0 = vector.load %arg1[%c0, %c0_0] : memref<8x128xbf16, #tpu.memory_space<vmem>>, vector<8x128xbf16>
    %c0_1 = arith.constant 0 : index
    %c0_2 = arith.constant 0 : index
    %1 = vector.load %arg2[%c0_1, %c0_2] : memref<16x8xbf16, #tpu.memory_space<vmem>>, vector<16x8xbf16>
    %cst = arith.constant dense<0.000000e+00> : vector<16x128xf32>
    %2 = tpu.matmul %1, %0, %cst {dimension_numbers = #tpu.dot_dimension_numbers<[1], [0], [0], [1], [0, 0, 1, 1], [], []>} : vector<16x8xbf16>, vector<8x128xbf16>, vector<16x128xf32> -> vector<16x128xf32>
    %c0_3 = arith.constant 0 : index
    %c0_4 = arith.constant 0 : index
    %3 = vector.load %arg3[%c0_3, %c0_4] : memref<16x1xf32, #tpu.memory_space<vmem>>, vector<16x1xf32>
    %4 = vector.broadcast %3 : vector<16x1xf32> to vector<16x128xf32>
    %5 = arith.addf %2, %4 : vector<16x128xf32>
    %cst_5 = arith.constant 0.000000e+00 : f32
    %6 = vector.broadcast %cst_5 : f32 to vector<16x128xf32>
    %7 = arith.maximumf %5, %6 : vector<16x128xf32>
    %8 = arith.truncf %7 : vector<16x128xf32> to vector<16x128xbf16>
    %c0_6 = arith.constant 0 : index
    %c0_7 = arith.constant 0 : index
    %9 = vector.load %arg4[%c0_6, %c0_7] : memref<32x16xbf16, #tpu.memory_space<vmem>>, vector<32x16xbf16>
    %cst_8 = arith.constant dense<0.000000e+00> : vector<32x128xf32>
    %10 = tpu.matmul %9, %8, %cst_8 {dimension_numbers = #tpu.dot_dimension_numbers<[1], [0], [0], [1], [0, 0, 1, 1], [], []>} : vector<32x16xbf16>, vector<16x128xbf16>, vector<32x128xf32> -> vector<32x128xf32>
    %c0_9 = arith.constant 0 : index
    %c0_10 = arith.constant 0 : index
    %11 = vector.load %arg5[%c0_9, %c0_10] : memref<32x1xf32, #tpu.memory_space<vmem>>, vector<32x1xf32>
    %12 = vector.broadcast %11 : vector<32x1xf32> to vector<32x128xf32>
    %13 = arith.addf %10, %12 : vector<32x128xf32>
    %cst_11 = arith.constant 0.000000e+00 : f32
    %14 = vector.broadcast %cst_11 : f32 to vector<32x128xf32>
    %15 = arith.maximumf %13, %14 : vector<32x128xf32>
    %16 = arith.truncf %15 : vector<32x128xf32> to vector<32x128xbf16>
    %c0_12 = arith.constant 0 : index
    %c0_13 = arith.constant 0 : index
    %17 = vector.load %arg6[%c0_12, %c0_13] : memref<64x32xbf16, #tpu.memory_space<vmem>>, vector<64x32xbf16>
    %cst_14 = arith.constant dense<0.000000e+00> : vector<64x128xf32>
    %18 = tpu.matmul %17, %16, %cst_14 {dimension_numbers = #tpu.dot_dimension_numbers<[1], [0], [0], [1], [0, 0, 1, 1], [], []>} : vector<64x32xbf16>, vector<32x128xbf16>, vector<64x128xf32> -> vector<64x128xf32>
    %c0_15 = arith.constant 0 : index
    %c0_16 = arith.constant 0 : index
    %19 = vector.load %arg7[%c0_15, %c0_16] : memref<64x1xf32, #tpu.memory_space<vmem>>, vector<64x1xf32>
    %20 = vector.broadcast %19 : vector<64x1xf32> to vector<64x128xf32>
    %21 = arith.addf %18, %20 : vector<64x128xf32>
    %cst_17 = arith.constant 0.000000e+00 : f32
    %22 = vector.broadcast %cst_17 : f32 to vector<64x128xf32>
    %23 = arith.maximumf %21, %22 : vector<64x128xf32>
    %c0_18 = arith.constant 0 : index
    %c0_19 = arith.constant 0 : index
    %24 = vector.load %arg8[%c0_18, %c0_19] : memref<64x1xf32, #tpu.memory_space<vmem>>, vector<64x1xf32>
    %25 = vector.broadcast %24 : vector<64x1xf32> to vector<64x128xf32>
    %26 = arith.mulf %23, %25 : vector<64x128xf32>
    %cst_20 = arith.constant dense<0.000000e+00> : vector<128xf32>
    %27 = vector.multi_reduction <add>, %26, %cst_20 [0] : vector<64x128xf32> to vector<128xf32>
    %28 = vector.shape_cast %27 : vector<128xf32> to vector<1x128xf32>
    %c0_21 = arith.constant 0 : index
    %c0_22 = arith.constant 0 : index
    %29 = vector.load %arg9[%c0_21, %c0_22] : memref<1x1xf32, #tpu.memory_space<vmem>>, vector<1x1xf32>
    %30 = vector.broadcast %29 : vector<1x1xf32> to vector<1x128xf32>
    %31 = arith.addf %28, %30 : vector<1x128xf32>
    %c0_23 = arith.constant 0 : index
    %c0_24 = arith.constant 0 : index
    %32 = vector.load %arg10[%c0_23, %c0_24] : memref<1x128xf32, #tpu.memory_space<vmem>>, vector<1x128xf32>
    tpu.vector_store %arg10[%c0_23, %c0_24], %31 {strides = array<i32>} : memref<1x128xf32, #tpu.memory_space<vmem>>, vector<1x128xf32>,
    return
  }
  func.func @transform_0(%arg0: i32) -> (i32, i32) {
    %c0_i32 = arith.constant 0 : i32
    %c0_i32_0 = arith.constant 0 : i32
    return %c0_i32, %arg0 : i32, i32
  }
  func.func @transform_1(%arg0: i32) -> (i32, i32) {
    %c0_i32 = arith.constant 0 : i32
    %c0_i32_0 = arith.constant 0 : i32
    %c0_i32_1 = arith.constant 0 : i32
    return %c0_i32, %c0_i32_0 : i32, i32
  }
  func.func @transform_2(%arg0: i32) -> (i32, i32) {
    %c0_i32 = arith.constant 0 : i32
    %c0_i32_0 = arith.constant 0 : i32
    %c0_i32_1 = arith.constant 0 : i32
    return %c0_i32, %c0_i32_0 : i32, i32
  }
  func.func @transform_3(%arg0: i32) -> (i32, i32) {
    %c0_i32 = arith.constant 0 : i32
    %c0_i32_0 = arith.constant 0 : i32
    %c0_i32_1 = arith.constant 0 : i32
    return %c0_i32, %c0_i32_0 : i32, i32
  }
  func.func @transform_4(%arg0: i32) -> (i32, i32) {
    %c0_i32 = arith.constant 0 : i32
    %c0_i32_0 = arith.constant 0 : i32
    %c0_i32_1 = arith.constant 0 : i32
    return %c0_i32, %c0_i32_0 : i32, i32
  }
  func.func @transform_5(%arg0: i32) -> (i32, i32) {
    %c0_i32 = arith.constant 0 : i32
    %c0_i32_0 = arith.constant 0 : i32
    %c0_i32_1 = arith.constant 0 : i32
    return %c0_i32, %c0_i32_0 : i32, i32
  }
  func.func @transform_6(%arg0: i32) -> (i32, i32) {
    %c0_i32 = arith.constant 0 : i32
    %c0_i32_0 = arith.constant 0 : i32
    %c0_i32_1 = arith.constant 0 : i32
    return %c0_i32, %c0_i32_0 : i32, i32
  }
  func.func @transform_7(%arg0: i32) -> (i32, i32) {
    %c0_i32 = arith.constant 0 : i32
    %c0_i32_0 = arith.constant 0 : i32
    %c0_i32_1 = arith.constant 0 : i32
    return %c0_i32, %c0_i32_0 : i32, i32
  }
  func.func @transform_8(%arg0: i32) -> (i32, i32) {
    %c0_i32 = arith.constant 0 : i32
    %c0_i32_0 = arith.constant 0 : i32
    %c0_i32_1 = arith.constant 0 : i32
    return %c0_i32, %c0_i32_0 : i32, i32
  }
  func.func @transform_9(%arg0: i32) -> (i32, i32) {
    %c0_i32 = arith.constant 0 : i32
    %c0_i32_0 = arith.constant 0 : i32
    return %c0_i32, %arg0 : i32, i32
  }
}

</mosaic_0001>

<llo_original>
// kernel: simple_nn_forward.1
$region0: #{simple_nn_forward.1}
  #allocation0 [shape = 'u32[]', space=smem, size = 0x4, offset = 0x4, fixed_abs, tag = 'smem constant byte address 0x4 - core index']
  #allocation1 [shape = 'u32[144,128]{1,0:T(1,128)}', space=vmem, size = 0x12000, scoped, tag = 'internal scratch']
  #allocation2 [shape = 'f32[1,1]{1,0:T(1,128)S(1)}', space=vmem, size = 0x200, scoped, tag = 'scoped memory for simple_nn_forward.1']
  %s0 = inlined_call_operand.vmem [shape: bf16[8,128], index: 0, kind: input, shape index: {}]
  %s1 = inlined_call_operand.vmem [shape: bf16[16,8], index: 1, kind: input, shape index: {}]
  %s2 = inlined_call_operand.vmem [shape: f32[16,1], index: 2, kind: input, shape index: {}]
  %s3 = inlined_call_operand.vmem [shape: bf16[32,16], index: 3, kind: input, shape index: {}]
  %s4 = inlined_call_operand.vmem [shape: f32[32,1], index: 4, kind: input, shape index: {}]
  %s5 = inlined_call_operand.vmem [shape: bf16[64,32], index: 5, kind: input, shape index: {}]
  %s6 = inlined_call_operand.vmem [shape: f32[64,1], index: 6, kind: input, shape index: {}]
  %s7 = inlined_call_operand.vmem [shape: f32[64,1], index: 7, kind: input, shape index: {}]
  %s8 = inlined_call_operand.<no memory space> [shape: f32[1,1], index: 8, kind: input, shape index: {}]
  %s9 = inlined_call_operand.vmem [shape: f32[1,128], index: 9, kind: output, shape index: {}]
  %s10 = sld [smem:[#allocation0]]
  $region46: #{simple_nn_forward.1} parent=0
    _
  %s12 = ssub.s32 1, %s10
  %s13 = scalar_select 0, %s12, %s10
  %v14 = vstv %s8
  %15 = vst [vmem:[#allocation2] sm:$0x1] %v14
  // Predicated region
  $region2: #{simple_nn_forward.1} parent=0 // pred_check
    _
  $region3: #{simple_nn_forward.1} parent=0 // pred_check_branch
    %17 = sbr.rel (0) target = $region5
  $region4: #{simple_nn_forward.1} parent=0 // pred_region
    _
  $region5: #{simple_nn_forward.1} parent=0 // pred_fallthru
    _
  // Predicated region
  $region6: #{simple_nn_forward.1} parent=0 // pred_check
    _
  $region7: #{simple_nn_forward.1} parent=0 // pred_check_branch
    %19 = sbr.rel (0) target = $region9
  $region8: #{simple_nn_forward.1} parent=0 // pred_region
    _
  $region9: #{simple_nn_forward.1} parent=0 // pred_fallthru
    _
  // Predicated region
  $region10: #{simple_nn_forward.1} parent=0 // pred_check
    _
  $region11: #{simple_nn_forward.1} parent=0 // pred_check_branch
    %21 = sbr.rel (0) target = $region13
  $region12: #{simple_nn_forward.1} parent=0 // pred_region
    _
  $region13: #{simple_nn_forward.1} parent=0 // pred_fallthru
    _
  // Predicated region
  $region14: #{simple_nn_forward.1} parent=0 // pred_check
    _
  $region15: #{simple_nn_forward.1} parent=0 // pred_check_branch
    %23 = sbr.rel (0) target = $region17
  $region16: #{simple_nn_forward.1} parent=0 // pred_region
    _
  $region17: #{simple_nn_forward.1} parent=0 // pred_fallthru
    _
  // Predicated region
  $region18: #{simple_nn_forward.1} parent=0 // pred_check
    _
  $region19: #{simple_nn_forward.1} parent=0 // pred_check_branch
    %25 = sbr.rel (0) target = $region21
  $region20: #{simple_nn_forward.1} parent=0 // pred_region
    _
  $region21: #{simple_nn_forward.1} parent=0 // pred_fallthru
    _
  // Predicated region
  $region22: #{simple_nn_forward.1} parent=0 // pred_check
    _
  $region23: #{simple_nn_forward.1} parent=0 // pred_check_branch
    %27 = sbr.rel (0) target = $region25
  $region24: #{simple_nn_forward.1} parent=0 // pred_region
    _
  $region25: #{simple_nn_forward.1} parent=0 // pred_fallthru
    _
  // Predicated region
  $region26: #{simple_nn_forward.1} parent=0 // pred_check
    _
  $region27: #{simple_nn_forward.1} parent=0 // pred_check_branch
    %29 = sbr.rel (0) target = $region29
  $region28: #{simple_nn_forward.1} parent=0 // pred_region
    _
  $region29: #{simple_nn_forward.1} parent=0 // pred_fallthru
    _
  // Predicated region
  $region30: #{simple_nn_forward.1} parent=0 // pred_check
    _
  $region31: #{simple_nn_forward.1} parent=0 // pred_check_branch
    %31 = sbr.rel (0) target = $region33
  $region32: #{simple_nn_forward.1} parent=0 // pred_region
    _
  $region33: #{simple_nn_forward.1} parent=0 // pred_fallthru
    _
  // Predicated region
  $region34: #{simple_nn_forward.1} parent=0 // pred_check
    _
  $region35: #{simple_nn_forward.1} parent=0 // pred_check_branch
    %33 = sbr.rel (0) target = $region37
  $region36: #{simple_nn_forward.1} parent=0 // pred_region
    _
  $region37: #{simple_nn_forward.1} parent=0 // pred_fallthru
    _
  %v35 = vld [vmem:[%s0] sm:$0xf]
  %v36 = vld [vmem:[%s1] sm:$0xf]
  %v37 = vld [vmem:[%s1 + $0x4] sm:$0xf]
  %v38 = vld [vmem:[%s2] sm:$0xff]
  %v39 = vld [vmem:[%s2 + $0x8] sm:$0xff]
  %41 = vset.pattern.permute.xlu0 0
  %42 = vperm.xlu0 %41, %v38
  %v43 = vpop.permute.xlu0 %42
  %46 = vset.pattern.permute.xlu0 0
  %47 = vperm.xlu0 %46, %v39
  %v48 = vpop.permute.xlu0 %47
  %v52 = vunpack.c.l.b16 %v36
  %v53 = vunpack.c.l.b16 %v37
  %v54 = vpack.c.b16 %v53, %v52
  %vm55 = vcmask 64512
  %v57 = vsel %vm55, %v54, 0
  %vm59 = vcmask 1043456
  %v61 = vsel %vm59, %v35, 0
  %63 = vmatprep.subr.bf16.mxu0 0
  %64 = vmatpush1.bf16.msra.mxu0 0
  %65 = vmatprep.subr.bf16.mxu0 0
  %66 = vmatpush1.bf16.msra.mxu0 0
  %67 = vmatprep.subr.bf16.mxu0 0
  %68 = vmatpush1.bf16.msra.mxu0 0
  %69 = vmatprep.subr.bf16.mxu0 0
  %70 = vmatpush1.bf16.msra.mxu0 0
  %71 = vmatprep.subr.bf16.mxu0 0
  %72 = vmatpush1.bf16.msra.mxu0 0
  %73 = vmatprep.subr.bf16.mxu0 0
  %74 = vmatpush1.bf16.msra.mxu0 0
  %75 = vmatprep.subr.bf16.mxu0 0
  %76 = vmatpush1.bf16.msra.mxu0 0
  %77 = vmatprep.subr.bf16.mxu0 0
  %78 = vmatpush1.bf16.msra.mxu0 %v61
  %79 = vmatprep.subr.bf16.mxu0 0
  %80 = vmatpush2.bf16.msra.mxu0 0
  %81 = vmatprep.subr.bf16.mxu0 0
  %82 = vmatpush2.bf16.msra.mxu0 0
  %83 = vmatprep.subr.bf16.mxu0 0
  %84 = vmatpush2.bf16.msra.mxu0 0
  %85 = vmatprep.subr.bf16.mxu0 0
  %86 = vmatpush2.bf16.msra.mxu0 0
  %87 = vmatprep.subr.bf16.mxu0 0
  %88 = vmatpush2.bf16.msra.mxu0 0
  %89 = vmatprep.subr.bf16.mxu0 0
  %90 = vmatpush2.bf16.msra.mxu0 0
  %91 = vmatprep.subr.bf16.mxu0 0
  %92 = vmatpush2.bf16.msra.mxu0 0
  %93 = vmatprep.subr.bf16.mxu0 0
  %94 = vmatpush2.bf16.msra.mxu0 0
  %95 = vmatprep.mubr.bf16.mxu0 0
  %96 = vmatmul.mubr.bf16.gmra.mxu0 %v57
  %v97 = vpop.f32.mrf.mxu0
  %v98 = vadd.f32 %v43, %v97
  %v99 = vpop.f32.mrf.mxu0
  %v100 = vpop.f32.mrf.mxu0
  %v101 = vadd.f32 %v48, %v100
  %v102 = vpop.f32.mrf.mxu0
  %103 = vdwg.mxu0
  %v104 = vmax.f32 %v98, 0.0
  %v105 = vmax.f32 %v101, 0.0
  %v106 = vpack.c.bf16 %v105, %v104
  %v107 = vld [vmem:[%s3] sm:$0xf]
  %v108 = vld [vmem:[%s3 + $0x4] sm:$0xf]
  %v109 = vld [vmem:[%s3 + $0x8] sm:$0xf]
  %v110 = vld [vmem:[%s3 + $0xc] sm:$0xf]
  %v111 = vld [vmem:[%s4] sm:$0xff]
  %v112 = vld [vmem:[%s4 + $0x8] sm:$0xff]
  %v113 = vld [vmem:[%s4 + $0x10] sm:$0xff]
  %v114 = vld [vmem:[%s4 + $0x18] sm:$0xff]
  %116 = vset.pattern.permute.xlu0 0
  %117 = vperm.xlu0 %116, %v111
  %v118 = vpop.permute.xlu0 %117
  %121 = vset.pattern.permute.xlu0 0
  %122 = vperm.xlu0 %121, %v112
  %v123 = vpop.permute.xlu0 %122
  %126 = vset.pattern.permute.xlu0 0
  %127 = vperm.xlu0 %126, %v113
  %v128 = vpop.permute.xlu0 %127
  %131 = vset.pattern.permute.xlu0 0
  %132 = vperm.xlu0 %131, %v114
  %v133 = vpop.permute.xlu0 %132
  %v139 = vunpack.c.l.b16 %v107
  %v140 = vunpack.c.l.b16 %v108
  %v141 = vunpack.c.l.b16 %v109
  %v142 = vunpack.c.l.b16 %v110
  %v143 = vpack.c.b16 %v140, %v139
  %v144 = vpack.c.b16 %v142, %v141
  %vm145 = vcmask 130048
  %v147 = vsel %vm145, %v143, 0
  %v150 = vsel %vm145, %v144, 0
  %152 = vmatprep.subr.bf16.mxu0 0
  %153 = vmatpush1.bf16.msra.mxu0 0
  %154 = vmatprep.subr.bf16.mxu0 0
  %155 = vmatpush1.bf16.msra.mxu0 0
  %156 = vmatprep.subr.bf16.mxu0 0
  %157 = vmatpush1.bf16.msra.mxu0 0
  %158 = vmatprep.subr.bf16.mxu0 0
  %159 = vmatpush1.bf16.msra.mxu0 0
  %160 = vmatprep.subr.bf16.mxu0 0
  %161 = vmatpush1.bf16.msra.mxu0 0
  %162 = vmatprep.subr.bf16.mxu0 0
  %163 = vmatpush1.bf16.msra.mxu0 0
  %164 = vmatprep.subr.bf16.mxu0 0
  %165 = vmatpush1.bf16.msra.mxu0 0
  %166 = vmatprep.subr.bf16.mxu0 0
  %167 = vmatpush1.bf16.msra.mxu0 %v106
  %168 = vmatprep.subr.bf16.mxu0 0
  %169 = vmatpush2.bf16.msra.mxu0 0
  %170 = vmatprep.subr.bf16.mxu0 0
  %171 = vmatpush2.bf16.msra.mxu0 0
  %172 = vmatprep.subr.bf16.mxu0 0
  %173 = vmatpush2.bf16.msra.mxu0 0
  %174 = vmatprep.subr.bf16.mxu0 0
  %175 = vmatpush2.bf16.msra.mxu0 0
  %176 = vmatprep.subr.bf16.mxu0 0
  %177 = vmatpush2.bf16.msra.mxu0 0
  %178 = vmatprep.subr.bf16.mxu0 0
  %179 = vmatpush2.bf16.msra.mxu0 0
  %180 = vmatprep.subr.bf16.mxu0 0
  %181 = vmatpush2.bf16.msra.mxu0 0
  %182 = vmatprep.subr.bf16.mxu0 0
  %183 = vmatpush2.bf16.msra.mxu0 0
  %184 = vmatprep.mubr.bf16.mxu0 0
  %185 = vmatmul.mubr.bf16.gmra.mxu0 %v147
  %v186 = vpop.f32.mrf.mxu0
  %v187 = vadd.f32 %v118, %v186
  %v188 = vpop.f32.mrf.mxu0
  %v189 = vpop.f32.mrf.mxu0
  %v190 = vadd.f32 %v123, %v189
  %v191 = vpop.f32.mrf.mxu0
  %192 = vmatprep.mubr.bf16.mxu0 0
  %193 = vmatmul.mubr.bf16.gmra.mxu0 %v150
  %v194 = vpop.f32.mrf.mxu0
  %v195 = vadd.f32 %v128, %v194
  %v196 = vpop.f32.mrf.mxu0
  %v197 = vpop.f32.mrf.mxu0
  %v198 = vadd.f32 %v133, %v197
  %v199 = vpop.f32.mrf.mxu0
  %200 = vdwg.mxu0
  %v201 = vmax.f32 %v187, 0.0
  %v202 = vmax.f32 %v190, 0.0
  %v203 = vmax.f32 %v195, 0.0
  %v204 = vmax.f32 %v198, 0.0
  %v205 = vpack.c.bf16 %v202, %v201
  %v206 = vpack.c.bf16 %v204, %v203
  %v207 = vld [vmem:[%s5] sm:$0xf]
  %v208 = vld [vmem:[%s5 + $0x4] sm:$0xf]
  %v209 = vld [vmem:[%s5 + $0x8] sm:$0xf]
  %v210 = vld [vmem:[%s5 + $0xc] sm:$0xf]
  %v211 = vld [vmem:[%s5 + $0x10] sm:$0xf]
  %v212 = vld [vmem:[%s5 + $0x14] sm:$0xf]
  %v213 = vld [vmem:[%s5 + $0x18] sm:$0xf]
  %v214 = vld [vmem:[%s5 + $0x1c] sm:$0xf]
  %v215 = vld [vmem:[%s6] sm:$0xff]
  %v216 = vld [vmem:[%s6 + $0x8] sm:$0xff]
  %v217 = vld [vmem:[%s6 + $0x10] sm:$0xff]
  %v218 = vld [vmem:[%s6 + $0x18] sm:$0xff]
  %v219 = vld [vmem:[%s6 + $0x20] sm:$0xff]
  %v220 = vld [vmem:[%s6 + $0x28] sm:$0xff]
  %v221 = vld [vmem:[%s6 + $0x30] sm:$0xff]
  %v222 = vld [vmem:[%s6 + $0x38] sm:$0xff]
  %224 = vset.pattern.permute.xlu0 0
  %225 = vperm.xlu0 %224, %v215
  %v226 = vpop.permute.xlu0 %225
  %229 = vset.pattern.permute.xlu0 0
  %230 = vperm.xlu0 %229, %v216
  %v231 = vpop.permute.xlu0 %230
  %234 = vset.pattern.permute.xlu0 0
  %235 = vperm.xlu0 %234, %v217
  %v236 = vpop.permute.xlu0 %235
  %239 = vset.pattern.permute.xlu0 0
  %240 = vperm.xlu0 %239, %v218
  %v241 = vpop.permute.xlu0 %240
  %244 = vset.pattern.permute.xlu0 0
  %245 = vperm.xlu0 %244, %v219
  %v246 = vpop.permute.xlu0 %245
  %249 = vset.pattern.permute.xlu0 0
  %250 = vperm.xlu0 %249, %v220
  %v251 = vpop.permute.xlu0 %250
  %254 = vset.pattern.permute.xlu0 0
  %255 = vperm.xlu0 %254, %v221
  %v256 = vpop.permute.xlu0 %255
  %259 = vset.pattern.permute.xlu0 0
  %260 = vperm.xlu0 %259, %v222
  %v261 = vpop.permute.xlu0 %260
  %v271 = vunpack.c.l.b16 %v207
  %v272 = vunpack.c.l.b16 %v208
  %v273 = vunpack.c.l.b16 %v209
  %v274 = vunpack.c.l.b16 %v210
  %v275 = vunpack.c.l.b16 %v211
  %v276 = vunpack.c.l.b16 %v212
  %v277 = vunpack.c.l.b16 %v213
  %v278 = vunpack.c.l.b16 %v214
  %v279 = vpack.c.b16 %v272, %v271
  %v280 = vpack.c.b16 %v274, %v273
  %v281 = vpack.c.b16 %v276, %v275
  %v282 = vpack.c.b16 %v278, %v277
  %vm283 = vcmask 261120
  %v285 = vsel %vm283, %v279, 0
  %v288 = vsel %vm283, %v280, 0
  %v291 = vsel %vm283, %v281, 0
  %v294 = vsel %vm283, %v282, 0
  %296 = vmatprep.subr.bf16.mxu0 0
  %297 = vmatpush1.bf16.msra.mxu0 0
  %298 = vmatprep.subr.bf16.mxu0 0
  %299 = vmatpush1.bf16.msra.mxu0 0
  %300 = vmatprep.subr.bf16.mxu0 0
  %301 = vmatpush1.bf16.msra.mxu0 0
  %302 = vmatprep.subr.bf16.mxu0 0
  %303 = vmatpush1.bf16.msra.mxu0 0
  %304 = vmatprep.subr.bf16.mxu0 0
  %305 = vmatpush1.bf16.msra.mxu0 0
  %306 = vmatprep.subr.bf16.mxu0 0
  %307 = vmatpush1.bf16.msra.mxu0 0
  %308 = vmatprep.subr.bf16.mxu0 0
  %309 = vmatpush1.bf16.msra.mxu0 %v206
  %310 = vmatprep.subr.bf16.mxu0 0
  %311 = vmatpush1.bf16.msra.mxu0 %v205
  %312 = vmatprep.subr.bf16.mxu0 0
  %313 = vmatpush2.bf16.msra.mxu0 0
  %314 = vmatprep.subr.bf16.mxu0 0
  %315 = vmatpush2.bf16.msra.mxu0 0
  %316 = vmatprep.subr.bf16.mxu0 0
  %317 = vmatpush2.bf16.msra.mxu0 0
  %318 = vmatprep.subr.bf16.mxu0 0
  %319 = vmatpush2.bf16.msra.mxu0 0
  %320 = vmatprep.subr.bf16.mxu0 0
  %321 = vmatpush2.bf16.msra.mxu0 0
  %322 = vmatprep.subr.bf16.mxu0 0
  %323 = vmatpush2.bf16.msra.mxu0 0
  %324 = vmatprep.subr.bf16.mxu0 0
  %325 = vmatpush2.bf16.msra.mxu0 0
  %326 = vmatprep.subr.bf16.mxu0 0
  %327 = vmatpush2.bf16.msra.mxu0 0
  %328 = vmatprep.mubr.bf16.mxu0 0
  %329 = vmatmul.mubr.bf16.gmra.mxu0 %v285
  %v330 = vpop.f32.mrf.mxu0
  %v331 = vadd.f32 %v226, %v330
  %v332 = vpop.f32.mrf.mxu0
  %v333 = vpop.f32.mrf.mxu0
  %v334 = vadd.f32 %v231, %v333
  %v335 = vpop.f32.mrf.mxu0
  %336 = vmatprep.mubr.bf16.mxu0 0
  %337 = vmatmul.mubr.bf16.gmra.mxu0 %v288
  %v338 = vpop.f32.mrf.mxu0
  %v339 = vadd.f32 %v236, %v338
  %v340 = vpop.f32.mrf.mxu0
  %v341 = vpop.f32.mrf.mxu0
  %v342 = vadd.f32 %v241, %v341
  %v343 = vpop.f32.mrf.mxu0
  %344 = vmatprep.mubr.bf16.mxu0 0
  %345 = vmatmul.mubr.bf16.gmra.mxu0 %v291
  %v346 = vpop.f32.mrf.mxu0
  %v347 = vadd.f32 %v246, %v346
  %v348 = vpop.f32.mrf.mxu0
  %v349 = vpop.f32.mrf.mxu0
  %v350 = vadd.f32 %v251, %v349
  %v351 = vpop.f32.mrf.mxu0
  %352 = vmatprep.mubr.bf16.mxu0 0
  %353 = vmatmul.mubr.bf16.gmra.mxu0 %v294
  %v354 = vpop.f32.mrf.mxu0
  %v355 = vadd.f32 %v256, %v354
  %v356 = vpop.f32.mrf.mxu0
  %v357 = vpop.f32.mrf.mxu0
  %v358 = vadd.f32 %v261, %v357
  %v359 = vpop.f32.mrf.mxu0
  %360 = vdwg.mxu0
  %v361 = vmax.f32 %v331, 0.0
  %v362 = vmax.f32 %v334, 0.0
  %v363 = vmax.f32 %v339, 0.0
  %v364 = vmax.f32 %v342, 0.0
  %v365 = vmax.f32 %v347, 0.0
  %v366 = vmax.f32 %v350, 0.0
  %v367 = vmax.f32 %v355, 0.0
  %v368 = vmax.f32 %v358, 0.0
  %v369 = vld [vmem:[%s7] sm:$0xff]
  %v370 = vld [vmem:[%s7 + $0x8] sm:$0xff]
  %v371 = vld [vmem:[%s7 + $0x10] sm:$0xff]
  %v372 = vld [vmem:[%s7 + $0x18] sm:$0xff]
  %v373 = vld [vmem:[%s7 + $0x20] sm:$0xff]
  %v374 = vld [vmem:[%s7 + $0x28] sm:$0xff]
  %v375 = vld [vmem:[%s7 + $0x30] sm:$0xff]
  %v376 = vld [vmem:[%s7 + $0x38] sm:$0xff]
  %378 = vset.pattern.permute.xlu0 0
  %379 = vperm.xlu0 %378, %v369
  %v380 = vpop.permute.xlu0 %379
  %383 = vset.pattern.permute.xlu0 0
  %384 = vperm.xlu0 %383, %v370
  %v385 = vpop.permute.xlu0 %384
  %388 = vset.pattern.permute.xlu0 0
  %389 = vperm.xlu0 %388, %v371
  %v390 = vpop.permute.xlu0 %389
  %393 = vset.pattern.permute.xlu0 0
  %394 = vperm.xlu0 %393, %v372
  %v395 = vpop.permute.xlu0 %394
  %398 = vset.pattern.permute.xlu0 0
  %399 = vperm.xlu0 %398, %v373
  %v400 = vpop.permute.xlu0 %399
  %403 = vset.pattern.permute.xlu0 0
  %404 = vperm.xlu0 %403, %v374
  %v405 = vpop.permute.xlu0 %404
  %408 = vset.pattern.permute.xlu0 0
  %409 = vperm.xlu0 %408, %v375
  %v410 = vpop.permute.xlu0 %409
  %413 = vset.pattern.permute.xlu0 0
  %414 = vperm.xlu0 %413, %v376
  %v415 = vpop.permute.xlu0 %414
  %v417 = vmul.f32 %v361, %v380
  %v418 = vmul.f32 %v362, %v385
  %v419 = vmul.f32 %v363, %v390
  %v420 = vmul.f32 %v364, %v395
  %v421 = vmul.f32 %v365, %v400
  %v422 = vmul.f32 %v366, %v405
  %v423 = vmul.f32 %v367, %v410
  %v424 = vmul.f32 %v368, %v415
  %v425 = vadd.f32 %v417, %v418
  %v426 = vadd.f32 %v425, %v419
  %v427 = vadd.f32 %v426, %v420
  %v428 = vadd.f32 %v427, %v421
  %v429 = vadd.f32 %v428, %v422
  %v430 = vadd.f32 %v429, %v423
  %v431 = vadd.f32 %v430, %v424
  %v432 = vrot.slane %v431, 4
  %v433 = vadd.f32 %v431, %v432
  %v434 = vrot.slane %v433, 2
  %v435 = vadd.f32 %v433, %v434
  %v436 = vrot.slane %v435, 1
  %v437 = vadd.f32 %v435, %v436
  %v438 = vld [vmem:[#allocation2] sm:$0x1]
  %440 = vset.pattern.permute.xlu0 0
  %441 = vperm.xlu0 %440, %v438
  %v442 = vpop.permute.xlu0 %441
  %v444 = vlaneseq
  %v445 = vshrl.u32 %v444, 7
  %v446 = vsub.s32 0, %v445
  %v447 = vrot.slane %v442, %v446
  %v448 = vadd.f32 %v437, %v447
  %449 = vst [vmem:[%s9] sm:$0x1] %v448
  // Predicated region
  $region38: #{simple_nn_forward.1} parent=0 // pred_check
    _
  $region39: #{simple_nn_forward.1} parent=0 // pred_check_branch
    %451 = sbr.rel (0) target = $region41
  $region40: #{simple_nn_forward.1} parent=0 // pred_region
    _
  $region41: #{simple_nn_forward.1} parent=0 // pred_fallthru
    _
  // Predicated region
  $region42: #{simple_nn_forward.1} parent=0 // pred_check
    _
  $region43: #{simple_nn_forward.1} parent=0 // pred_check_branch
    %453 = sbr.rel (0) target = $region45
  $region44: #{simple_nn_forward.1} parent=0 // pred_region
    _
  $region45: #{simple_nn_forward.1} parent=0 // pred_fallthru
    _

</llo_original>
